<compile_context>
chip_gen: v7x
topology: tpu7x:2x2x1
jax: 0.10.0
libtpu: 0.0.40
codegen_flags: <defaults>
</compile_context>

<pallas_src>
import functools
import math

import jax
import jax.numpy as jnp
from jax import lax
from jax.experimental import pallas as pl
from jax.experimental.pallas import tpu as pltpu


def _mhsa_kernel(*refs, scale, num_heads, latent_dim, masked):
    """One batch element of fused multi-head self-attention.

    refs (masked)   : x_ref (N,E), mask_ref (N,N) int8, wqkv_ref (E,3*NH*D),
                      wo_ref (NH*D,E), o_ref (N,E)
    refs (unmasked) : x_ref (N,E), wqkv_ref, wo_ref, o_ref
    """
    if masked:
        x_ref, mask_ref, wqkv_ref, wo_ref, o_ref = refs
    else:
        x_ref, wqkv_ref, wo_ref, o_ref = refs
        mask_ref = None

    nh, d = num_heads, latent_dim
    hd = nh * d

    x = x_ref[...]                                   # (N, E), native dtype
    # Single wide QKV projection: minor dim = 3*NH*D on the MXU, f32 accumulate.
    qkv = jnp.dot(x, wqkv_ref[...],
                  preferred_element_type=jnp.float32)          # (N, 3*NH*D) f32

    wo = wo_ref[...]                                 # (NH*D, E), resident

    if masked:
        # int8 mask -> f32 -> boolean keep mask (binary mask semantics).
        keep = mask_ref[...].astype(jnp.float32) != 0.0        # (N, N) bool

    y = None
    for h in range(nh):                              # static unroll over heads
        q_h = qkv[:, h * d:(h + 1) * d]                             # (N, D)
        k_h = qkv[:, hd + h * d: hd + (h + 1) * d]                  # (N, D)
        v_h = qkv[:, 2 * hd + h * d: 2 * hd + (h + 1) * d]          # (N, D)

        # q . k^T : contract the last dims directly (no explicit k transpose).
        s = lax.dot_general(q_h, k_h, (((1,), (1,)), ((), ())),
                            preferred_element_type=jnp.float32) * scale  # (N, N)
        if masked:
            # select == score*m + (-1e8)*(1-m) of the reference for binary masks
            s = jnp.where(keep, s, -100000000.0)

        # numerically-stable softmax over keys, kept in f32
        s = s - jnp.max(s, axis=-1, keepdims=True)
        p = jnp.exp(s)
        p = p * pl.reciprocal(jnp.sum(p, axis=-1, keepdims=True), approx=True)

        attn = jnp.dot(p, v_h, preferred_element_type=jnp.float32)       # (N, D)
        # per-head output projection (static row slice of the fused w_o)
        contrib = jnp.dot(attn, wo[h * d:(h + 1) * d, :],
                          preferred_element_type=jnp.float32)            # (N, E)
        y = contrib if y is None else y + contrib

    o_ref[...] = y.astype(o_ref.dtype)


def multi_head_self_attention(x, w_q, w_k, w_v, w_o, mask=None):
    """x: [B,N,E]; w_q/w_k/w_v: [NH,E,D]; w_o: [NH,D,E]; mask: [B,N,N] or None."""
    B, N, E = x.shape
    NH, _, D = w_q.shape
    scale = 1.0 / math.sqrt(D)

    # Fuse the per-head projections once (wrapper-side layout plumbing):
    #   w_qkv[:, h*D:(h+1)*D]          == w_q[h]
    #   w_qkv[:, NH*D + h*D : ...]     == w_k[h]
    #   w_qkv[:, 2*NH*D + h*D : ...]   == w_v[h]
    #   w_o_f[h*D:(h+1)*D, :]          == w_o[h]
    def pack(w):  # [NH, E, D] -> [E, NH*D]
        return jnp.transpose(w, (1, 0, 2)).reshape(E, NH * D)

    w_qkv = jnp.concatenate([pack(w_q), pack(w_k), pack(w_v)], axis=1)  # (E, 3*NH*D)
    w_o_f = w_o.reshape(NH * D, E)                                      # (NH*D, E)

    kernel = functools.partial(_mhsa_kernel, scale=scale, num_heads=NH,
                               latent_dim=D, masked=mask is not None)

    x_spec = pl.BlockSpec((None, N, E), lambda b: (b, 0, 0))
    wqkv_spec = pl.BlockSpec((E, 3 * NH * D), lambda b: (0, 0))   # resident weights
    wo_spec = pl.BlockSpec((NH * D, E), lambda b: (0, 0))         # resident weights
    out_spec = pl.BlockSpec((None, N, E), lambda b: (b, 0, 0))

    if mask is None:
        in_specs = [x_spec, wqkv_spec, wo_spec]
        args = (x, w_qkv, w_o_f)
    else:
        mask_i8 = (mask != 0).astype(jnp.int8)    # 4x fewer mask bytes over HBM
        in_specs = [x_spec,
                    pl.BlockSpec((None, N, N), lambda b: (b, 0, 0)),
                    wqkv_spec, wo_spec]
        args = (x, mask_i8, w_qkv, w_o_f)

    return pl.pallas_call(
        kernel,
        out_shape=jax.ShapeDtypeStruct((B, N, E), x.dtype),
        grid_spec=pltpu.PrefetchScalarGridSpec(
            num_scalar_prefetch=0,
            grid=(B,),
            in_specs=in_specs,
            out_specs=out_spec,
        ),
        compiler_params=pltpu.CompilerParams(
            dimension_semantics=("parallel",)),
    )(*args)


def _reference(x, w_q, w_k, w_v, w_o, mask=None):
    """Pure-JAX reference mirroring the PyTorch einsum formulation."""
    D = w_q.shape[-1]
    q = jnp.einsum('blj,njd->bnld', x, w_q)
    k = jnp.einsum('blj,njd->bnld', x, w_k)
    v = jnp.einsum('blj,njd->bnld', x, w_v)
    score = jnp.einsum('bnij,bnkj->bnik', q, k) / math.sqrt(D)
    if mask is not None:
        m = mask[:, None]
        score = score * m + (-100000000.0) * (1 - m)
    score = jax.nn.softmax(score, axis=-1)
    out = jnp.einsum('bnij,bnjk->bnik', score, v)
    return jnp.einsum('bnlj,njk->blk', out, w_o)


def _xavier_normal(key, shape):
    fan_in = shape[1] * shape[2]
    fan_out = shape[0] * shape[2]
    std = math.sqrt(2.0 / (fan_in + fan_out))
    return jax.random.normal(key, shape, dtype=jnp.float32) * std


if __name__ == "__main__":
    B, N, E = 2, 8, 32     # batch, sequence length, embed_dim
    NH, D = 4, 16          # num_heads, latent_dim

    key = jax.random.PRNGKey(0)
    kx, kq, kk, kv, ko, km = jax.random.split(key, 6)

    x = jax.random.normal(kx, (B, N, E), dtype=jnp.float32)
    w_q = _xavier_normal(kq, (NH, E, D))
    w_k = _xavier_normal(kk, (NH, E, D))
    w_v = _xavier_normal(kv, (NH, E, D))
    w_o = _xavier_normal(ko, (NH, D, E))
    mask = (jax.random.uniform(km, (B, N, N)) > 0.2).astype(jnp.float32)

    # no-mask path (mask=None in the PyTorch forward) — no mask stream at all
    out = multi_head_self_attention(x, w_q, w_k, w_v, w_o, mask=None)
    out = jax.block_until_ready(out)
    ref = _reference(x, w_q, w_k, w_v, w_o, mask=None)
    assert jnp.allclose(out, ref, atol=1e-3, rtol=1e-3), "no-mask mismatch"

    # masked path
    out_m = multi_head_self_attention(x, w_q, w_k, w_v, w_o, mask=mask)
    out_m = jax.block_until_ready(out_m)
    ref_m = _reference(x, w_q, w_k, w_v, w_o, mask=mask)
    assert jnp.allclose(out_m, ref_m, atol=1e-3, rtol=1e-3), "masked mismatch"

    print("KERNEL_OK")
</pallas_src>

<mosaic_0001>
module attributes {stable_mosaic.version = 11 : i64} {
  func.func @_mhsa_kernel(%arg0: i32, %arg1: memref<1x8x32xf32, #tpu.memory_space<vmem>>, %arg2: memref<32x192xf32, #tpu.memory_space<vmem>>, %arg3: memref<64x32xf32, #tpu.memory_space<vmem>>, %arg4: memref<1x8x32xf32, #tpu.memory_space<vmem>>) attributes {dimension_semantics = [#tpu.dimension_semantics<parallel>], iteration_bounds = array<i64: 2>, scalar_prefetch = 0 : i64, scratch_operands = 0 : i64, tpu.core_type = #tpu.core_type<tc>, window_params = [{transform_indices = @transform_0, window_bounds = array<i64: 1, 8, 32>}, {pipeline_mode = #tpu.pipeline_mode<synchronous>, transform_indices = @transform_1, window_bounds = array<i64: 32, 192>}, {pipeline_mode = #tpu.pipeline_mode<synchronous>, transform_indices = @transform_2, window_bounds = array<i64: 64, 32>}, {transform_indices = @transform_3, window_bounds = array<i64: 1, 8, 32>}]} {
    %c0 = arith.constant 0 : index
    %c0_0 = arith.constant 0 : index
    %c0_1 = arith.constant 0 : index
    %0 = vector.load %arg1[%c0, %c0_0, %c0_1] : memref<1x8x32xf32, #tpu.memory_space<vmem>>, vector<1x8x32xf32>
    %1 = vector.shape_cast %0 : vector<1x8x32xf32> to vector<8x32xf32>
    %c0_2 = arith.constant 0 : index
    %c0_3 = arith.constant 0 : index
    %2 = vector.load %arg2[%c0_2, %c0_3] : memref<32x192xf32, #tpu.memory_space<vmem>>, vector<32x192xf32>
    %cst = arith.constant dense<0.000000e+00> : vector<8x192xf32>
    %3 = tpu.matmul %1, %2, %cst {dimension_numbers = #tpu.dot_dimension_numbers<[1], [0], [0], [1], [0, 0, 1, 1], [], []>} : vector<8x32xf32>, vector<32x192xf32>, vector<8x192xf32> -> vector<8x192xf32>
    %c0_4 = arith.constant 0 : index
    %c0_5 = arith.constant 0 : index
    %4 = vector.load %arg3[%c0_4, %c0_5] : memref<64x32xf32, #tpu.memory_space<vmem>>, vector<64x32xf32>
    %5 = vector.extract_strided_slice %3 {offsets = [0, 0], sizes = [8, 16], strides = [1, 1]} : vector<8x192xf32> to vector<8x16xf32>
    %6 = vector.extract_strided_slice %3 {offsets = [0, 64], sizes = [8, 16], strides = [1, 1]} : vector<8x192xf32> to vector<8x16xf32>
    %7 = vector.extract_strided_slice %3 {offsets = [0, 128], sizes = [8, 16], strides = [1, 1]} : vector<8x192xf32> to vector<8x16xf32>
    %cst_6 = arith.constant dense<0.000000e+00> : vector<8x8xf32>
    %8 = tpu.matmul %5, %6, %cst_6 {dimension_numbers = #tpu.dot_dimension_numbers<[1], [1], [0], [0], [0, 0, 1, 0], [], []>} : vector<8x16xf32>, vector<8x16xf32>, vector<8x8xf32> -> vector<8x8xf32>
    %cst_7 = arith.constant 2.500000e-01 : f32
    %9 = vector.broadcast %cst_7 : f32 to vector<8x8xf32>
    %10 = arith.mulf %8, %9 : vector<8x8xf32>
    %cst_8 = arith.constant dense<0xFF800000> : vector<8xf32>
    %11 = vector.multi_reduction <maximumf>, %10, %cst_8 [1] : vector<8x8xf32> to vector<8xf32>
    %12 = vector.shape_cast %11 : vector<8xf32> to vector<8x1xf32>
    %13 = vector.broadcast %12 : vector<8x1xf32> to vector<8x8xf32>
    %14 = arith.subf %10, %13 : vector<8x8xf32>
    %15 = math.exp %14 : vector<8x8xf32>
    %cst_9 = arith.constant dense<0.000000e+00> : vector<8xf32>
    %16 = vector.multi_reduction <add>, %15, %cst_9 [1] : vector<8x8xf32> to vector<8xf32>
    %17 = vector.shape_cast %16 : vector<8xf32> to vector<8x1xf32>
    %18 = tpu.reciprocal %17 {approx = true} : vector<8x1xf32> -> vector<8x1xf32>
    %19 = vector.broadcast %18 : vector<8x1xf32> to vector<8x8xf32>
    %20 = arith.mulf %15, %19 : vector<8x8xf32>
    %cst_10 = arith.constant dense<0.000000e+00> : vector<8x16xf32>
    %21 = tpu.matmul %20, %7, %cst_10 {dimension_numbers = #tpu.dot_dimension_numbers<[1], [0], [0], [1], [0, 0, 1, 1], [], []>} : vector<8x8xf32>, vector<8x16xf32>, vector<8x16xf32> -> vector<8x16xf32>
    %22 = vector.extract_strided_slice %4 {offsets = [0, 0], sizes = [16, 32], strides = [1, 1]} : vector<64x32xf32> to vector<16x32xf32>
    %cst_11 = arith.constant dense<0.000000e+00> : vector<8x32xf32>
    %23 = tpu.matmul %21, %22, %cst_11 {dimension_numbers = #tpu.dot_dimension_numbers<[1], [0], [0], [1], [0, 0, 1, 1], [], []>} : vector<8x16xf32>, vector<16x32xf32>, vector<8x32xf32> -> vector<8x32xf32>
    %24 = vector.extract_strided_slice %3 {offsets = [0, 16], sizes = [8, 16], strides = [1, 1]} : vector<8x192xf32> to vector<8x16xf32>
    %25 = vector.extract_strided_slice %3 {offsets = [0, 80], sizes = [8, 16], strides = [1, 1]} : vector<8x192xf32> to vector<8x16xf32>
    %26 = vector.extract_strided_slice %3 {offsets = [0, 144], sizes = [8, 16], strides = [1, 1]} : vector<8x192xf32> to vector<8x16xf32>
    %cst_12 = arith.constant dense<0.000000e+00> : vector<8x8xf32>
    %27 = tpu.matmul %24, %25, %cst_12 {dimension_numbers = #tpu.dot_dimension_numbers<[1], [1], [0], [0], [0, 0, 1, 0], [], []>} : vector<8x16xf32>, vector<8x16xf32>, vector<8x8xf32> -> vector<8x8xf32>
    %cst_13 = arith.constant 2.500000e-01 : f32
    %28 = vector.broadcast %cst_13 : f32 to vector<8x8xf32>
    %29 = arith.mulf %27, %28 : vector<8x8xf32>
    %cst_14 = arith.constant dense<0xFF800000> : vector<8xf32>
    %30 = vector.multi_reduction <maximumf>, %29, %cst_14 [1] : vector<8x8xf32> to vector<8xf32>
    %31 = vector.shape_cast %30 : vector<8xf32> to vector<8x1xf32>
    %32 = vector.broadcast %31 : vector<8x1xf32> to vector<8x8xf32>
    %33 = arith.subf %29, %32 : vector<8x8xf32>
    %34 = math.exp %33 : vector<8x8xf32>
    %cst_15 = arith.constant dense<0.000000e+00> : vector<8xf32>
    %35 = vector.multi_reduction <add>, %34, %cst_15 [1] : vector<8x8xf32> to vector<8xf32>
    %36 = vector.shape_cast %35 : vector<8xf32> to vector<8x1xf32>
    %37 = tpu.reciprocal %36 {approx = true} : vector<8x1xf32> -> vector<8x1xf32>
    %38 = vector.broadcast %37 : vector<8x1xf32> to vector<8x8xf32>
    %39 = arith.mulf %34, %38 : vector<8x8xf32>
    %cst_16 = arith.constant dense<0.000000e+00> : vector<8x16xf32>
    %40 = tpu.matmul %39, %26, %cst_16 {dimension_numbers = #tpu.dot_dimension_numbers<[1], [0], [0], [1], [0, 0, 1, 1], [], []>} : vector<8x8xf32>, vector<8x16xf32>, vector<8x16xf32> -> vector<8x16xf32>
    %41 = vector.extract_strided_slice %4 {offsets = [16, 0], sizes = [16, 32], strides = [1, 1]} : vector<64x32xf32> to vector<16x32xf32>
    %cst_17 = arith.constant dense<0.000000e+00> : vector<8x32xf32>
    %42 = tpu.matmul %40, %41, %cst_17 {dimension_numbers = #tpu.dot_dimension_numbers<[1], [0], [0], [1], [0, 0, 1, 1], [], []>} : vector<8x16xf32>, vector<16x32xf32>, vector<8x32xf32> -> vector<8x32xf32>
    %43 = arith.addf %23, %42 : vector<8x32xf32>
    %44 = vector.extract_strided_slice %3 {offsets = [0, 32], sizes = [8, 16], strides = [1, 1]} : vector<8x192xf32> to vector<8x16xf32>
    %45 = vector.extract_strided_slice %3 {offsets = [0, 96], sizes = [8, 16], strides = [1, 1]} : vector<8x192xf32> to vector<8x16xf32>
    %46 = vector.extract_strided_slice %3 {offsets = [0, 160], sizes = [8, 16], strides = [1, 1]} : vector<8x192xf32> to vector<8x16xf32>
    %cst_18 = arith.constant dense<0.000000e+00> : vector<8x8xf32>
    %47 = tpu.matmul %44, %45, %cst_18 {dimension_numbers = #tpu.dot_dimension_numbers<[1], [1], [0], [0], [0, 0, 1, 0], [], []>} : vector<8x16xf32>, vector<8x16xf32>, vector<8x8xf32> -> vector<8x8xf32>
    %cst_19 = arith.constant 2.500000e-01 : f32
    %48 = vector.broadcast %cst_19 : f32 to vector<8x8xf32>
    %49 = arith.mulf %47, %48 : vector<8x8xf32>
    %cst_20 = arith.constant dense<0xFF800000> : vector<8xf32>
    %50 = vector.multi_reduction <maximumf>, %49, %cst_20 [1] : vector<8x8xf32> to vector<8xf32>
    %51 = vector.shape_cast %50 : vector<8xf32> to vector<8x1xf32>
    %52 = vector.broadcast %51 : vector<8x1xf32> to vector<8x8xf32>
    %53 = arith.subf %49, %52 : vector<8x8xf32>
    %54 = math.exp %53 : vector<8x8xf32>
    %cst_21 = arith.constant dense<0.000000e+00> : vector<8xf32>
    %55 = vector.multi_reduction <add>, %54, %cst_21 [1] : vector<8x8xf32> to vector<8xf32>
    %56 = vector.shape_cast %55 : vector<8xf32> to vector<8x1xf32>
    %57 = tpu.reciprocal %56 {approx = true} : vector<8x1xf32> -> vector<8x1xf32>
    %58 = vector.broadcast %57 : vector<8x1xf32> to vector<8x8xf32>
    %59 = arith.mulf %54, %58 : vector<8x8xf32>
    %cst_22 = arith.constant dense<0.000000e+00> : vector<8x16xf32>
    %60 = tpu.matmul %59, %46, %cst_22 {dimension_numbers = #tpu.dot_dimension_numbers<[1], [0], [0], [1], [0, 0, 1, 1], [], []>} : vector<8x8xf32>, vector<8x16xf32>, vector<8x16xf32> -> vector<8x16xf32>
    %61 = vector.extract_strided_slice %4 {offsets = [32, 0], sizes = [16, 32], strides = [1, 1]} : vector<64x32xf32> to vector<16x32xf32>
    %cst_23 = arith.constant dense<0.000000e+00> : vector<8x32xf32>
    %62 = tpu.matmul %60, %61, %cst_23 {dimension_numbers = #tpu.dot_dimension_numbers<[1], [0], [0], [1], [0, 0, 1, 1], [], []>} : vector<8x16xf32>, vector<16x32xf32>, vector<8x32xf32> -> vector<8x32xf32>
    %63 = arith.addf %43, %62 : vector<8x32xf32>
    %64 = vector.extract_strided_slice %3 {offsets = [0, 48], sizes = [8, 16], strides = [1, 1]} : vector<8x192xf32> to vector<8x16xf32>
    %65 = vector.extract_strided_slice %3 {offsets = [0, 112], sizes = [8, 16], strides = [1, 1]} : vector<8x192xf32> to vector<8x16xf32>
    %66 = vector.extract_strided_slice %3 {offsets = [0, 176], sizes = [8, 16], strides = [1, 1]} : vector<8x192xf32> to vector<8x16xf32>
    %cst_24 = arith.constant dense<0.000000e+00> : vector<8x8xf32>
    %67 = tpu.matmul %64, %65, %cst_24 {dimension_numbers = #tpu.dot_dimension_numbers<[1], [1], [0], [0], [0, 0, 1, 0], [], []>} : vector<8x16xf32>, vector<8x16xf32>, vector<8x8xf32> -> vector<8x8xf32>
    %cst_25 = arith.constant 2.500000e-01 : f32
    %68 = vector.broadcast %cst_25 : f32 to vector<8x8xf32>
    %69 = arith.mulf %67, %68 : vector<8x8xf32>
    %cst_26 = arith.constant dense<0xFF800000> : vector<8xf32>
    %70 = vector.multi_reduction <maximumf>, %69, %cst_26 [1] : vector<8x8xf32> to vector<8xf32>
    %71 = vector.shape_cast %70 : vector<8xf32> to vector<8x1xf32>
    %72 = vector.broadcast %71 : vector<8x1xf32> to vector<8x8xf32>
    %73 = arith.subf %69, %72 : vector<8x8xf32>
    %74 = math.exp %73 : vector<8x8xf32>
    %cst_27 = arith.constant dense<0.000000e+00> : vector<8xf32>
    %75 = vector.multi_reduction <add>, %74, %cst_27 [1] : vector<8x8xf32> to vector<8xf32>
    %76 = vector.shape_cast %75 : vector<8xf32> to vector<8x1xf32>
    %77 = tpu.reciprocal %76 {approx = true} : vector<8x1xf32> -> vector<8x1xf32>
    %78 = vector.broadcast %77 : vector<8x1xf32> to vector<8x8xf32>
    %79 = arith.mulf %74, %78 : vector<8x8xf32>
    %cst_28 = arith.constant dense<0.000000e+00> : vector<8x16xf32>
    %80 = tpu.matmul %79, %66, %cst_28 {dimension_numbers = #tpu.dot_dimension_numbers<[1], [0], [0], [1], [0, 0, 1, 1], [], []>} : vector<8x8xf32>, vector<8x16xf32>, vector<8x16xf32> -> vector<8x16xf32>
    %81 = vector.extract_strided_slice %4 {offsets = [48, 0], sizes = [16, 32], strides = [1, 1]} : vector<64x32xf32> to vector<16x32xf32>
    %cst_29 = arith.constant dense<0.000000e+00> : vector<8x32xf32>
    %82 = tpu.matmul %80, %81, %cst_29 {dimension_numbers = #tpu.dot_dimension_numbers<[1], [0], [0], [1], [0, 0, 1, 1], [], []>} : vector<8x16xf32>, vector<16x32xf32>, vector<8x32xf32> -> vector<8x32xf32>
    %83 = arith.addf %63, %82 : vector<8x32xf32>
    %c0_30 = arith.constant 0 : index
    %c0_31 = arith.constant 0 : index
    %c0_32 = arith.constant 0 : index
    %84 = vector.load %arg4[%c0_30, %c0_31, %c0_32] : memref<1x8x32xf32, #tpu.memory_space<vmem>>, vector<1x8x32xf32>
    %85 = vector.shape_cast %84 : vector<1x8x32xf32> to vector<8x32xf32>
    %86 = vector.shape_cast %83 : vector<8x32xf32> to vector<1x8x32xf32>
    tpu.vector_store %arg4[%c0_30, %c0_31, %c0_32], %86 {strides = array<i32>} : memref<1x8x32xf32, #tpu.memory_space<vmem>>, vector<1x8x32xf32>,
    return
  }
  func.func @transform_0(%arg0: i32) -> (i32, i32, i32) {
    %c0_i32 = arith.constant 0 : i32
    %c0_i32_0 = arith.constant 0 : i32
    %c0_i32_1 = arith.constant 0 : i32
    return %arg0, %c0_i32, %c0_i32_0 : i32, i32, i32
  }
  func.func @transform_1(%arg0: i32) -> (i32, i32) {
    %c0_i32 = arith.constant 0 : i32
    %c0_i32_0 = arith.constant 0 : i32
    %c0_i32_1 = arith.constant 0 : i32
    return %c0_i32, %c0_i32_0 : i32, i32
  }
  func.func @transform_2(%arg0: i32) -> (i32, i32) {
    %c0_i32 = arith.constant 0 : i32
    %c0_i32_0 = arith.constant 0 : i32
    %c0_i32_1 = arith.constant 0 : i32
    return %c0_i32, %c0_i32_0 : i32, i32
  }
  func.func @transform_3(%arg0: i32) -> (i32, i32, i32) {
    %c0_i32 = arith.constant 0 : i32
    %c0_i32_0 = arith.constant 0 : i32
    %c0_i32_1 = arith.constant 0 : i32
    return %arg0, %c0_i32, %c0_i32_0 : i32, i32, i32
  }
}

</mosaic_0001>

<llo_original>
// kernel: tpu_custom_call.1
$region0: #{tpu_custom_call.1}
  #allocation0 [shape = 'u32[]', space=smem, size = 0x4, offset = 0x4, fixed_abs, tag = 'smem constant byte address 0x4 - core index']
  #allocation1 [shape = 'u32[144,128]{1,0:T(1,128)}', space=vmem, size = 0x12000, scoped, tag = 'internal scratch']
  %s0 = inlined_call_operand.vmem [shape: f32[2,8,32], index: 0, kind: input, shape index: {}]
  %s1 = inlined_call_operand.vmem [shape: f32[32,192], index: 1, kind: input, shape index: {}]
  %s2 = inlined_call_operand.vmem [shape: f32[64,32], index: 2, kind: input, shape index: {}]
  %s3 = inlined_call_operand.hbm [shape: f32[2,8,32], index: 3, kind: output, shape index: {}]
  %s4 = sld [smem:[#allocation0]]
  $region45: #{tpu_custom_call.1} parent=0
    _
  %s6 = ssub.s32 1, %s4
  %s7 = scalar_select 0, %s6, %s4
  $region1: #{tpu_custom_call.1} parent=0
    #allocation2 [shape = 'u8[8192]{0}', space=vmem, size = 0x2000, scoped, tag = 'output window, operand 0']
    #allocation3 [shape = 's32[2]{0}', space=sflag, size = 0x8, scoped, tag = 'scoped memory for tpu_custom_call.1']
    %8 = vsyncpa [#allocation3], 0
    %s9 = scalar_lea.sflag [#allocation3], 1
    %10 = vsyncpa %s9, 0
    loop: start=0, step=1, limit=4
    $region2: #{tpu_custom_call.1} parent=1 // loop_pre_header
      _
    $region3: #{tpu_custom_call.1} parent=1 // loop_header
      %s12 = sphi 0, %s16
      %p13 = scmp.ge.s32.totalorder %s12, 4
      %s22 = sphi 0, %s24
      %s25 = sphi 0, %s22
      %s26 = sphi 0, %s25
      %s42 = sphi 0, %s26
      %s46 = sphi 0, %s46
      %s48 = sphi 0, %s46
      %s49 = sphi 0, %s48
      %s63 = sphi 0, %s49
      %s67 = sphi 0, %s67
      %s69 = sphi 0, %s67
      %s70 = sphi 0, %s69
      %s84 = sphi 0, %s70
      %s90 = sphi 0, %s92
      %s93 = sphi 0, %s90
      %s94 = sphi 0, %s93
      %s110 = sphi 0, %s94
    $region4: #{tpu_custom_call.1} parent=1 // loop_header_branch
      %15 = sbr.rel (%p13) target = $region8
    $region5: #{tpu_custom_call.1} parent=1 // loop_body
      %s17 = ssub.s32 %s12, 1
      %s18 = ssub.s32 %s12, 2
      %s19 = sadd.s32 %s12, 1
      %s20 = ssub.s32 %s12, %s19
      %p21 = scmp.eq.s32.totalorder %s20, 0
      %s23 = sadd.s32 %s22, 1
      %s24 = scalar_select %p21, %s22, %s23
      %p27 = pneg %p21
      %p28 = scmp.eq.s32.totalorder %s12, 1
      %p29 = por %p27, %p28
      %p30 = scmp.ne.s32.totalorder %s22, %s25
      %p31 = scmp.eq.s32.totalorder %s12, 0
      %p32 = por %p30, %p31
      %p33 = scmp.ne.s32.totalorder %s22, %s25
      %p34 = scmp.eq.s32.totalorder %s17, 1
      %p35 = por %p33, %p34
      %p36 = scmp.ne.s32.totalorder %s25, %s26
      %p37 = scmp.eq.s32.totalorder %s17, 0
      %p38 = por %p36, %p37
      %p39 = scmp.ne.s32.totalorder %s25, %s26
      %p40 = scmp.eq.s32.totalorder %s18, 1
      %p41 = por %p39, %p40
      %p43 = scmp.ne.s32.totalorder %s26, %s42
      %p44 = scmp.eq.s32.totalorder %s18, 0
      %p45 = por %p43, %p44
      %s47 = sadd.s32 %s46, 1
      %p50 = scmp.eq.s32.totalorder %s12, 1
      %p51 = scmp.ne.s32.totalorder %s46, %s48
      %p52 = scmp.eq.s32.totalorder %s12, 0
      %p53 = por %p51, %p52
      %p54 = scmp.ne.s32.totalorder %s46, %s48
      %p55 = scmp.eq.s32.totalorder %s17, 1
      %p56 = por %p54, %p55
      %p57 = scmp.ne.s32.totalorder %s48, %s49
      %p58 = scmp.eq.s32.totalorder %s17, 0
      %p59 = por %p57, %p58
      %p60 = scmp.ne.s32.totalorder %s48, %s49
      %p61 = scmp.eq.s32.totalorder %s18, 1
      %p62 = por %p60, %p61
      %p64 = scmp.ne.s32.totalorder %s49, %s63
      %p65 = scmp.eq.s32.totalorder %s18, 0
      %p66 = por %p64, %p65
      %s68 = sadd.s32 %s67, 1
      %p71 = scmp.eq.s32.totalorder %s12, 1
      %p72 = scmp.ne.s32.totalorder %s67, %s69
      %p73 = scmp.eq.s32.totalorder %s12, 0
      %p74 = por %p72, %p73
      %p75 = scmp.ne.s32.totalorder %s67, %s69
      %p76 = scmp.eq.s32.totalorder %s17, 1
      %p77 = por %p75, %p76
      %p78 = scmp.ne.s32.totalorder %s69, %s70
      %p79 = scmp.eq.s32.totalorder %s17, 0
      %p80 = por %p78, %p79
      %p81 = scmp.ne.s32.totalorder %s69, %s70
      %p82 = scmp.eq.s32.totalorder %s18, 1
      %p83 = por %p81, %p82
      %p85 = scmp.ne.s32.totalorder %s70, %s84
      %p86 = scmp.eq.s32.totalorder %s18, 0
      %p87 = por %p85, %p86
      %s88 = ssub.s32 %s12, %s19
      %p89 = scmp.eq.s32.totalorder %s88, 0
      %s91 = sadd.s32 %s90, 1
      %s92 = scalar_select %p89, %s90, %s91
      %p95 = pneg %p89
      %p96 = scmp.eq.s32.totalorder %s12, 1
      %p97 = por %p95, %p96
      %p98 = scmp.ne.s32.totalorder %s90, %s93
      %p99 = scmp.eq.s32.totalorder %s12, 0
      %p100 = por %p98, %p99
      %p101 = scmp.ne.s32.totalorder %s90, %s93
      %p102 = scmp.eq.s32.totalorder %s17, 1
      %p103 = por %p101, %p102
      %p104 = scmp.ne.s32.totalorder %s93, %s94
      %p105 = scmp.eq.s32.totalorder %s17, 0
      %p106 = por %p104, %p105
      %p107 = scmp.ne.s32.totalorder %s93, %s94
      %p108 = scmp.eq.s32.totalorder %s18, 1
      %p109 = por %p107, %p108
      %p111 = scmp.ne.s32.totalorder %s94, %s110
      %p112 = scmp.eq.s32.totalorder %s18, 0
      %p113 = por %p111, %p112
      %p114 = scmp.le.s32.totalorder 1, %s12
      %p115 = scmp.lt.s32.totalorder %s12, 3
      %p116 = pnand %p114, %p115
      %p117 = pneg %p116
      // Predicated region
      $region9: #{tpu_custom_call.1} parent=5 // pred_check
        _
      $region10: #{tpu_custom_call.1} parent=5 // pred_check_branch
        %119 = sbr.rel (%p116) target = $region12
      $region11: #{tpu_custom_call.1} parent=5 // pred_region
        %s120 = ssub.s32 %s12, 1
        // Predicated region
        $region13: #{tpu_custom_call.1} parent=11 // pred_check
          %p121 = pneg %p59
        $region14: #{tpu_custom_call.1} parent=11 // pred_check_branch
          %123 = sbr.rel (%p121) target = $region16
        $region15: #{tpu_custom_call.1} parent=11 // pred_region
          _
        $region16: #{tpu_custom_call.1} parent=11 // pred_fallthru
          _
        // Predicated region
        $region17: #{tpu_custom_call.1} parent=11 // pred_check
          %p124 = pneg %p80
        $region18: #{tpu_custom_call.1} parent=11 // pred_check_branch
          %126 = sbr.rel (%p124) target = $region20
        $region19: #{tpu_custom_call.1} parent=11 // pred_region
          _
        $region20: #{tpu_custom_call.1} parent=11 // pred_fallthru
          _
      $region12: #{tpu_custom_call.1} parent=5 // pred_fallthru
        _
      %p127 = scmp.lt.s32.totalorder %s12, 2
      // Predicated region
      $region21: #{tpu_custom_call.1} parent=5 // pred_check
        %p128 = pneg %p127
      $region22: #{tpu_custom_call.1} parent=5 // pred_check_branch
        %130 = sbr.rel (%p128) target = $region24
      $region23: #{tpu_custom_call.1} parent=5 // pred_region
        // Predicated region
        $region25: #{tpu_custom_call.1} parent=23 // pred_check
          %p131 = pneg %p32
        $region26: #{tpu_custom_call.1} parent=23 // pred_check_branch
          %133 = sbr.rel (%p131) target = $region28
        $region27: #{tpu_custom_call.1} parent=23 // pred_region
          %p134 = scmp.lt.s32.totalorder %s12, 1
          %s135 = scalar_select %p134, %s12, 1
          %s136 = smul.addr %s135, 8
          %s137 = scalar_lea.vmem %s0, %s136
        $region28: #{tpu_custom_call.1} parent=23 // pred_fallthru
          _
      $region24: #{tpu_custom_call.1} parent=5 // pred_fallthru
        _
      %p138 = scmp.le.s32.totalorder 1, %s12
      %p139 = scmp.lt.s32.totalorder %s12, 3
      %p140 = pnand %p138, %p139
      %p141 = pneg %p140
      // Predicated region
      $region29: #{tpu_custom_call.1} parent=5 // pred_check
        _
      $region30: #{tpu_custom_call.1} parent=5 // pred_check_branch
        %143 = sbr.rel (%p140) target = $region32
      $region31: #{tpu_custom_call.1} parent=5 // pred_region
        %s144 = ssub.s32 %s12, 1
        %p145 = scmp.lt.s32.totalorder %s17, 1
        %s146 = scalar_select %p145, %s17, 1
        %s147 = smul.addr %s146, 8
        %s148 = scalar_lea.vmem %s0, %s147
        %p149 = pneg %p38
        %p150 = pneg %p35
        %p151 = pneg %p59
        %p152 = pneg %p56
        %p153 = pneg %p80
        %p154 = pneg %p77
        %p155 = pneg %p106
        %p156 = pneg %p103
        %s157 = sand.u32 %s93, 1
        %s158 = scalar_lea.sflag [#allocation3], %s157
        %s159 = sand.u32 %s93, 1
        %s160 = smul.addr %s159, 8
        %s161 = scalar_lea.vmem [#allocation2], %s160
        %p162 = scmp.lt.s32.totalorder %s17, 1
        %s163 = scalar_select %p162, %s17, 1
        %s164 = smul.addr %s163, 8
        %s165 = scalar_lea.vmem %s0, %s164
        %v166 = vld [vmem:[%s165] sm:$0xff]
        %v167 = vld [vmem:[%s1] sm:$0xff]
        %v168 = vld [vmem:[%s1 + $0x8] sm:$0xff]
        %v169 = vld [vmem:[%s1 + $0x10] sm:$0xff]
        %v170 = vld [vmem:[%s1 + $0x18] sm:$0xff]
        %v171 = vld [vmem:[%s1 + $0x20] sm:$0xff]
        %v172 = vld [vmem:[%s1 + $0x28] sm:$0xff]
        %v173 = vld [vmem:[%s1 + $0x30] sm:$0xff]
        %v174 = vld [vmem:[%s1 + $0x38] sm:$0xff]
        %vm175 = vcmask 261120
        %v177 = vsel %vm175, %v166, 0
        %179 = vmatprep.subr.mxu0 %v168
        %180 = vmatpush1.msra.mxu0 %v167
        %181 = vmatprep.subr.mxu0 %v170
        %182 = vmatpush1.msra.mxu0 %v169
        %183 = vmatprep.subr.mxu0 %v172
        %184 = vmatpush1.msra.mxu0 %v171
        %185 = vmatprep.subr.mxu0 %v174
        %186 = vmatpush1.msra.mxu0 %v173
        %187 = vmatprep.subr.mxu0 0.0
        %188 = vmatpush1.msra.mxu0 0.0
        %189 = vmatprep.subr.mxu0 0.0
        %190 = vmatpush1.msra.mxu0 0.0
        %191 = vmatprep.subr.mxu0 0.0
        %192 = vmatpush1.msra.mxu0 0.0
        %193 = vmatprep.subr.mxu0 0.0
        %194 = vmatpush1.msra.mxu0 0.0
        %195 = vmatprep.subr.mxu0 0.0
        %196 = vmatpush1.msra.mxu0 0.0
        %197 = vmatprep.subr.mxu0 0.0
        %198 = vmatpush1.msra.mxu0 0.0
        %199 = vmatprep.subr.mxu0 0.0
        %200 = vmatpush1.msra.mxu0 0.0
        %201 = vmatprep.subr.mxu0 0.0
        %202 = vmatpush1.msra.mxu0 0.0
        %203 = vmatprep.subr.mxu0 0.0
        %204 = vmatpush1.msra.mxu0 0.0
        %205 = vmatprep.subr.mxu0 0.0
        %206 = vmatpush1.msra.mxu0 0.0
        %207 = vmatprep.subr.mxu0 0.0
        %208 = vmatpush1.msra.mxu0 0.0
        %209 = vmatprep.subr.mxu0 0.0
        %210 = vmatpush1.msra.mxu0 0.0
        %211 = vmatprep.subr.mxu0 0.0
        %212 = vmatpush1.msra.mxu0 0.0
        %213 = vmatprep.subr.mxu0 0.0
        %214 = vmatpush1.msra.mxu0 0.0
        %215 = vmatprep.subr.mxu0 0.0
        %216 = vmatpush1.msra.mxu0 0.0
        %217 = vmatprep.subr.mxu0 0.0
        %218 = vmatpush1.msra.mxu0 0.0
        %219 = vmatprep.subr.mxu0 0.0
        %220 = vmatpush1.msra.mxu0 0.0
        %221 = vmatprep.subr.mxu0 0.0
        %222 = vmatpush1.msra.mxu0 0.0
        %223 = vmatprep.subr.mxu0 0.0
        %224 = vmatpush1.msra.mxu0 0.0
        %225 = vmatprep.subr.mxu0 0.0
        %226 = vmatpush1.msra.mxu0 0.0
        %227 = vmatprep.subr.mxu0 0.0
        %228 = vmatpush1.msra.mxu0 0.0
        %229 = vmatprep.subr.mxu0 0.0
        %230 = vmatpush1.msra.mxu0 0.0
        %231 = vmatprep.subr.mxu0 0.0
        %232 = vmatpush1.msra.mxu0 0.0
        %233 = vmatprep.subr.mxu0 0.0
        %234 = vmatpush1.msra.mxu0 0.0
        %235 = vmatprep.subr.mxu0 0.0
        %236 = vmatpush1.msra.mxu0 0.0
        %237 = vmatprep.subr.mxu0 0.0
        %238 = vmatpush1.msra.mxu0 0.0
        %239 = vmatprep.subr.mxu0 0.0
        %240 = vmatpush1.msra.mxu0 0.0
        %241 = vmatprep.subr.mxu0 0.0
        %242 = vmatpush1.msra.mxu0 0.0
        %243 = vmatprep.mubr.f32.mxu0 0.0
        %244 = vmatmul.mubr.f32.gmra.mrb[0].mxu0 %v177
        %v245 = vpop.f32.mrb[0].mxu0
        %v246 = vadd.f32 0.0, %v245
        %v247 = vpop.f32.mrb[0].mxu0
        %v248 = vadd.f32 0.0, %v247
        %249 = vdwg.mxu0
        %v250 = vld [vmem:[%s2] sm:$0xff]
        %v251 = vld [vmem:[%s2 + $0x8] sm:$0xff]
        %v252 = vld [vmem:[%s2 + $0x10] sm:$0xff]
        %v253 = vld [vmem:[%s2 + $0x18] sm:$0xff]
        %v254 = vld [vmem:[%s2 + $0x20] sm:$0xff]
        %v255 = vld [vmem:[%s2 + $0x28] sm:$0xff]
        %v256 = vld [vmem:[%s2 + $0x30] sm:$0xff]
        %v257 = vld [vmem:[%s2 + $0x38] sm:$0xff]
        %259 = vrot.lane.b32.xlu0 %v246, 64
        %v260 = vpop.permute.xlu0 %259
        %vm261 = vcmask 130048
        %v262 = vsel %vm261, %v246, 0
        %v264 = vsel %vm261, %v260, 0
        %266 = vmatprep.subr.mxu0 0.0
        %267 = vmatpush1.xpose.msra.mxu0 %v264
        %268 = vmatprep.subr.mxu0 0.0
        %269 = vmatpush1.xpose.msra.mxu0 0.0
        %270 = vmatprep.subr.mxu0 0.0
        %271 = vmatpush1.xpose.msra.mxu0 0.0
        %272 = vmatprep.subr.mxu0 0.0
        %273 = vmatpush1.xpose.msra.mxu0 0.0
        %274 = vmatprep.subr.mxu0 0.0
        %275 = vmatpush1.xpose.msra.mxu0 0.0
        %276 = vmatprep.subr.mxu0 0.0
        %277 = vmatpush1.xpose.msra.mxu0 0.0
        %278 = vmatprep.subr.mxu0 0.0
        %279 = vmatpush1.xpose.msra.mxu0 0.0
        %280 = vmatprep.subr.mxu0 0.0
        %281 = vmatpush1.xpose.msra.mxu0 0.0
        %282 = vmatprep.subr.mxu0 0.0
        %283 = vmatpush1.xpose.msra.mxu0 0.0
        %284 = vmatprep.subr.mxu0 0.0
        %285 = vmatpush1.xpose.msra.mxu0 0.0
        %286 = vmatprep.subr.mxu0 0.0
        %287 = vmatpush1.xpose.msra.mxu0 0.0
        %288 = vmatprep.subr.mxu0 0.0
        %289 = vmatpush1.xpose.msra.mxu0 0.0
        %290 = vmatprep.subr.mxu0 0.0
        %291 = vmatpush1.xpose.msra.mxu0 0.0
        %292 = vmatprep.subr.mxu0 0.0
        %293 = vmatpush1.xpose.msra.mxu0 0.0
        %294 = vmatprep.subr.mxu0 0.0
        %295 = vmatpush1.xpose.msra.mxu0 0.0
        %296 = vmatprep.subr.mxu0 0.0
        %297 = vmatpush1.xpose.msra.mxu0 0.0
        %298 = vmatprep.subr.mxu0 0.0
        %299 = vmatpush1.xpose.msra.mxu0 0.0
        %300 = vmatprep.subr.mxu0 0.0
        %301 = vmatpush1.xpose.msra.mxu0 0.0
        %302 = vmatprep.subr.mxu0 0.0
        %303 = vmatpush1.xpose.msra.mxu0 0.0
        %304 = vmatprep.subr.mxu0 0.0
        %305 = vmatpush1.xpose.msra.mxu0 0.0
        %306 = vmatprep.subr.mxu0 0.0
        %307 = vmatpush1.xpose.msra.mxu0 0.0
        %308 = vmatprep.subr.mxu0 0.0
        %309 = vmatpush1.xpose.msra.mxu0 0.0
        %310 = vmatprep.subr.mxu0 0.0
        %311 = vmatpush1.xpose.msra.mxu0 0.0
        %312 = vmatprep.subr.mxu0 0.0
        %313 = vmatpush1.xpose.msra.mxu0 0.0
        %314 = vmatprep.subr.mxu0 0.0
        %315 = vmatpush1.xpose.msra.mxu0 0.0
        %316 = vmatprep.subr.mxu0 0.0
        %317 = vmatpush1.xpose.msra.mxu0 0.0
        %318 = vmatprep.subr.mxu0 0.0
        %319 = vmatpush1.xpose.msra.mxu0 0.0
        %320 = vmatprep.subr.mxu0 0.0
        %321 = vmatpush1.xpose.msra.mxu0 0.0
        %322 = vmatprep.subr.mxu0 0.0
        %323 = vmatpush1.xpose.msra.mxu0 0.0
        %324 = vmatprep.subr.mxu0 0.0
        %325 = vmatpush1.xpose.msra.mxu0 0.0
        %326 = vmatprep.subr.mxu0 0.0
        %327 = vmatpush1.xpose.msra.mxu0 0.0
        %328 = vmatprep.subr.mxu0 0.0
        %329 = vmatpush1.xpose.msra.mxu0 0.0
        %330 = vmatprep.mubr.f32.mxu0 0.0
        %331 = vmatmul.mubr.f32.gmra.mrb[0].mxu0 %v262
        %v332 = vpop.f32.mrb[0].mxu0
        %v333 = vadd.f32 0.0, %v332
        %v334 = vpop.f32.mrb[0].mxu0
        %335 = vdwg.mxu0
        %v336 = vmul.f32 %v333, 0.25
        %vm337 = vcmask 64512
        %v338 = vsel %vm337, %v336, -inf
        %339 = vmax.xlane.f32.xlu0 %v338
        %v340 = vpop.xlane.xlu0 %339
        %v341 = vsub.f32 %v336, %v340
        %v342 = vmul.f32 %v341, 1.442695
        %v343 = vpow.pop %v342
        %v344 = vsel %vm337, %v343, 0.0
        %345 = vadd.xlane.f32.xlu0 %v344
        %v346 = vpop.xlane.xlu0 %345
        %v347 = vrcp.pop %v346
        %v348 = vmul.f32 %v343, %v347
        %v350 = vsel %vm337, %v348, 0
        %352 = vmatprep.subr.mxu0 0.0
        %353 = vmatpush1.msra.mxu0 %v248
        %354 = vmatprep.subr.mxu0 0.0
        %355 = vmatpush1.msra.mxu0 0.0
        %356 = vmatprep.subr.mxu0 0.0
        %357 = vmatpush1.msra.mxu0 0.0
        %358 = vmatprep.subr.mxu0 0.0
        %359 = vmatpush1.msra.mxu0 0.0
        %360 = vmatprep.subr.mxu0 0.0
        %361 = vmatpush1.msra.mxu0 0.0
        %362 = vmatprep.subr.mxu0 0.0
        %363 = vmatpush1.msra.mxu0 0.0
        %364 = vmatprep.subr.mxu0 0.0
        %365 = vmatpush1.msra.mxu0 0.0
        %366 = vmatprep.subr.mxu0 0.0
        %367 = vmatpush1.msra.mxu0 0.0
        %368 = vmatprep.subr.mxu0 0.0
        %369 = vmatpush1.msra.mxu0 0.0
        %370 = vmatprep.subr.mxu0 0.0
        %371 = vmatpush1.msra.mxu0 0.0
        %372 = vmatprep.subr.mxu0 0.0
        %373 = vmatpush1.msra.mxu0 0.0
        %374 = vmatprep.subr.mxu0 0.0
        %375 = vmatpush1.msra.mxu0 0.0
        %376 = vmatprep.subr.mxu0 0.0
        %377 = vmatpush1.msra.mxu0 0.0
        %378 = vmatprep.subr.mxu0 0.0
        %379 = vmatpush1.msra.mxu0 0.0
        %380 = vmatprep.subr.mxu0 0.0
        %381 = vmatpush1.msra.mxu0 0.0
        %382 = vmatprep.subr.mxu0 0.0
        %383 = vmatpush1.msra.mxu0 0.0
        %384 = vmatprep.subr.mxu0 0.0
        %385 = vmatpush1.msra.mxu0 0.0
        %386 = vmatprep.subr.mxu0 0.0
        %387 = vmatpush1.msra.mxu0 0.0
        %388 = vmatprep.subr.mxu0 0.0
        %389 = vmatpush1.msra.mxu0 0.0
        %390 = vmatprep.subr.mxu0 0.0
        %391 = vmatpush1.msra.mxu0 0.0
        %392 = vmatprep.subr.mxu0 0.0
        %393 = vmatpush1.msra.mxu0 0.0
        %394 = vmatprep.subr.mxu0 0.0
        %395 = vmatpush1.msra.mxu0 0.0
        %396 = vmatprep.subr.mxu0 0.0
        %397 = vmatpush1.msra.mxu0 0.0
        %398 = vmatprep.subr.mxu0 0.0
        %399 = vmatpush1.msra.mxu0 0.0
        %400 = vmatprep.subr.mxu0 0.0
        %401 = vmatpush1.msra.mxu0 0.0
        %402 = vmatprep.subr.mxu0 0.0
        %403 = vmatpush1.msra.mxu0 0.0
        %404 = vmatprep.subr.mxu0 0.0
        %405 = vmatpush1.msra.mxu0 0.0
        %406 = vmatprep.subr.mxu0 0.0
        %407 = vmatpush1.msra.mxu0 0.0
        %408 = vmatprep.subr.mxu0 0.0
        %409 = vmatpush1.msra.mxu0 0.0
        %410 = vmatprep.subr.mxu0 0.0
        %411 = vmatpush1.msra.mxu0 0.0
        %412 = vmatprep.subr.mxu0 0.0
        %413 = vmatpush1.msra.mxu0 0.0
        %414 = vmatprep.subr.mxu0 0.0
        %415 = vmatpush1.msra.mxu0 0.0
        %416 = vmatprep.mubr.f32.mxu0 0.0
        %417 = vmatmul.mubr.f32.gmra.mrb[0].mxu0 %v350
        %v418 = vpop.f32.mrb[0].mxu0
        %v419 = vadd.f32 0.0, %v418
        %v420 = vpop.f32.mrb[0].mxu0
        %421 = vdwg.mxu0
        %422 = vrot.lane.b32.xlu0 %v246, 112
        %v423 = vpop.permute.xlu0 %422
        %424 = vrot.lane.b32.xlu0 %v246, 48
        %v425 = vpop.permute.xlu0 %424
        %v426 = vsel %vm261, %v423, 0
        %v428 = vsel %vm261, %v425, 0
        %430 = vmatprep.subr.mxu0 0.0
        %431 = vmatpush1.xpose.msra.mxu0 %v428
        %432 = vmatprep.subr.mxu0 0.0
        %433 = vmatpush1.xpose.msra.mxu0 0.0
        %434 = vmatprep.subr.mxu0 0.0
        %435 = vmatpush1.xpose.msra.mxu0 0.0
        %436 = vmatprep.subr.mxu0 0.0
        %437 = vmatpush1.xpose.msra.mxu0 0.0
        %438 = vmatprep.subr.mxu0 0.0
        %439 = vmatpush1.xpose.msra.mxu0 0.0
        %440 = vmatprep.subr.mxu0 0.0
        %441 = vmatpush1.xpose.msra.mxu0 0.0
        %442 = vmatprep.subr.mxu0 0.0
        %443 = vmatpush1.xpose.msra.mxu0 0.0
        %444 = vmatprep.subr.mxu0 0.0
        %445 = vmatpush1.xpose.msra.mxu0 0.0
        %446 = vmatprep.subr.mxu0 0.0
        %447 = vmatpush1.xpose.msra.mxu0 0.0
        %448 = vmatprep.subr.mxu0 0.0
        %449 = vmatpush1.xpose.msra.mxu0 0.0
        %450 = vmatprep.subr.mxu0 0.0
        %451 = vmatpush1.xpose.msra.mxu0 0.0
        %452 = vmatprep.subr.mxu0 0.0
        %453 = vmatpush1.xpose.msra.mxu0 0.0
        %454 = vmatprep.subr.mxu0 0.0
        %455 = vmatpush1.xpose.msra.mxu0 0.0
        %456 = vmatprep.subr.mxu0 0.0
        %457 = vmatpush1.xpose.msra.mxu0 0.0
        %458 = vmatprep.subr.mxu0 0.0
        %459 = vmatpush1.xpose.msra.mxu0 0.0
        %460 = vmatprep.subr.mxu0 0.0
        %461 = vmatpush1.xpose.msra.mxu0 0.0
        %462 = vmatprep.subr.mxu0 0.0
        %463 = vmatpush1.xpose.msra.mxu0 0.0
        %464 = vmatprep.subr.mxu0 0.0
        %465 = vmatpush1.xpose.msra.mxu0 0.0
        %466 = vmatprep.subr.mxu0 0.0
        %467 = vmatpush1.xpose.msra.mxu0 0.0
        %468 = vmatprep.subr.mxu0 0.0
        %469 = vmatpush1.xpose.msra.mxu0 0.0
        %470 = vmatprep.subr.mxu0 0.0
        %471 = vmatpush1.xpose.msra.mxu0 0.0
        %472 = vmatprep.subr.mxu0 0.0
        %473 = vmatpush1.xpose.msra.mxu0 0.0
        %474 = vmatprep.subr.mxu0 0.0
        %475 = vmatpush1.xpose.msra.mxu0 0.0
        %476 = vmatprep.subr.mxu0 0.0
        %477 = vmatpush1.xpose.msra.mxu0 0.0
        %478 = vmatprep.subr.mxu0 0.0
        %479 = vmatpush1.xpose.msra.mxu0 0.0
        %480 = vmatprep.subr.mxu0 0.0
        %481 = vmatpush1.xpose.msra.mxu0 0.0
        %482 = vmatprep.subr.mxu0 0.0
        %483 = vmatpush1.xpose.msra.mxu0 0.0
        %484 = vmatprep.subr.mxu0 0.0
        %485 = vmatpush1.xpose.msra.mxu0 0.0
        %486 = vmatprep.subr.mxu0 0.0
        %487 = vmatpush1.xpose.msra.mxu0 0.0
        %488 = vmatprep.subr.mxu0 0.0
        %489 = vmatpush1.xpose.msra.mxu0 0.0
        %490 = vmatprep.subr.mxu0 0.0
        %491 = vmatpush1.xpose.msra.mxu0 0.0
        %492 = vmatprep.subr.mxu0 0.0
        %493 = vmatpush1.xpose.msra.mxu0 0.0
        %494 = vmatprep.mubr.f32.mxu0 0.0
        %495 = vmatmul.mubr.f32.gmra.mrb[0].mxu0 %v426
        %v496 = vpop.f32.mrb[0].mxu0
        %v497 = vadd.f32 0.0, %v496
        %v498 = vpop.f32.mrb[0].mxu0
        %499 = vdwg.mxu0
        %v500 = vmul.f32 %v497, 0.25
        %v501 = vsel %vm337, %v500, -inf
        %502 = vmax.xlane.f32.xlu0 %v501
        %v503 = vpop.xlane.xlu0 %502
        %v504 = vsub.f32 %v500, %v503
        %v505 = vmul.f32 %v504, 1.442695
        %v506 = vpow.pop %v505
        %v507 = vsel %vm337, %v506, 0.0
        %508 = vadd.xlane.f32.xlu0 %v507
        %v509 = vpop.xlane.xlu0 %508
        %v510 = vrcp.pop %v509
        %v511 = vmul.f32 %v506, %v510
        %513 = vrot.lane.b32.xlu0 %v248, 112
        %v514 = vpop.permute.xlu0 %513
        %v517 = vsel %vm337, %v511, 0
        %519 = vmatprep.subr.mxu0 0.0
        %520 = vmatpush1.msra.mxu0 %v514
        %521 = vmatprep.subr.mxu0 0.0
        %522 = vmatpush1.msra.mxu0 0.0
        %523 = vmatprep.subr.mxu0 0.0
        %524 = vmatpush1.msra.mxu0 0.0
        %525 = vmatprep.subr.mxu0 0.0
        %526 = vmatpush1.msra.mxu0 0.0
        %527 = vmatprep.subr.mxu0 0.0
        %528 = vmatpush1.msra.mxu0 0.0
        %529 = vmatprep.subr.mxu0 0.0
        %530 = vmatpush1.msra.mxu0 0.0
        %531 = vmatprep.subr.mxu0 0.0
        %532 = vmatpush1.msra.mxu0 0.0
        %533 = vmatprep.subr.mxu0 0.0
        %534 = vmatpush1.msra.mxu0 0.0
        %535 = vmatprep.subr.mxu0 0.0
        %536 = vmatpush1.msra.mxu0 0.0
        %537 = vmatprep.subr.mxu0 0.0
        %538 = vmatpush1.msra.mxu0 0.0
        %539 = vmatprep.subr.mxu0 0.0
        %540 = vmatpush1.msra.mxu0 0.0
        %541 = vmatprep.subr.mxu0 0.0
        %542 = vmatpush1.msra.mxu0 0.0
        %543 = vmatprep.subr.mxu0 0.0
        %544 = vmatpush1.msra.mxu0 0.0
        %545 = vmatprep.subr.mxu0 0.0
        %546 = vmatpush1.msra.mxu0 0.0
        %547 = vmatprep.subr.mxu0 0.0
        %548 = vmatpush1.msra.mxu0 0.0
        %549 = vmatprep.subr.mxu0 0.0
        %550 = vmatpush1.msra.mxu0 0.0
        %551 = vmatprep.subr.mxu0 0.0
        %552 = vmatpush1.msra.mxu0 0.0
        %553 = vmatprep.subr.mxu0 0.0
        %554 = vmatpush1.msra.mxu0 0.0
        %555 = vmatprep.subr.mxu0 0.0
        %556 = vmatpush1.msra.mxu0 0.0
        %557 = vmatprep.subr.mxu0 0.0
        %558 = vmatpush1.msra.mxu0 0.0
        %559 = vmatprep.subr.mxu0 0.0
        %560 = vmatpush1.msra.mxu0 0.0
        %561 = vmatprep.subr.mxu0 0.0
        %562 = vmatpush1.msra.mxu0 0.0
        %563 = vmatprep.subr.mxu0 0.0
        %564 = vmatpush1.msra.mxu0 0.0
        %565 = vmatprep.subr.mxu0 0.0
        %566 = vmatpush1.msra.mxu0 0.0
        %567 = vmatprep.subr.mxu0 0.0
        %568 = vmatpush1.msra.mxu0 0.0
        %569 = vmatprep.subr.mxu0 0.0
        %570 = vmatpush1.msra.mxu0 0.0
        %571 = vmatprep.subr.mxu0 0.0
        %572 = vmatpush1.msra.mxu0 0.0
        %573 = vmatprep.subr.mxu0 0.0
        %574 = vmatpush1.msra.mxu0 0.0
        %575 = vmatprep.subr.mxu0 0.0
        %576 = vmatpush1.msra.mxu0 0.0
        %577 = vmatprep.subr.mxu0 0.0
        %578 = vmatpush1.msra.mxu0 0.0
        %579 = vmatprep.subr.mxu0 0.0
        %580 = vmatpush1.msra.mxu0 0.0
        %581 = vmatprep.subr.mxu0 0.0
        %582 = vmatpush1.msra.mxu0 0.0
        %583 = vmatprep.mubr.f32.mxu0 0.0
        %584 = vmatmul.mubr.f32.gmra.mrb[0].mxu0 %v517
        %v585 = vpop.f32.mrb[0].mxu0
        %v586 = vadd.f32 0.0, %v585
        %v587 = vpop.f32.mrb[0].mxu0
        %588 = vdwg.mxu0
        %v590 = vsel %vm261, %v586, 0
        %592 = vmatprep.subr.mxu0 0.0
        %593 = vmatpush1.msra.mxu0 %v252
        %594 = vmatprep.subr.mxu0 0.0
        %595 = vmatpush1.msra.mxu0 %v253
        %596 = vmatprep.subr.mxu0 0.0
        %597 = vmatpush1.msra.mxu0 0.0
        %598 = vmatprep.subr.mxu0 0.0
        %599 = vmatpush1.msra.mxu0 0.0
        %600 = vmatprep.subr.mxu0 0.0
        %601 = vmatpush1.msra.mxu0 0.0
        %602 = vmatprep.subr.mxu0 0.0
        %603 = vmatpush1.msra.mxu0 0.0
        %604 = vmatprep.subr.mxu0 0.0
        %605 = vmatpush1.msra.mxu0 0.0
        %606 = vmatprep.subr.mxu0 0.0
        %607 = vmatpush1.msra.mxu0 0.0
        %608 = vmatprep.subr.mxu0 0.0
        %609 = vmatpush1.msra.mxu0 0.0
        %610 = vmatprep.subr.mxu0 0.0
        %611 = vmatpush1.msra.mxu0 0.0
        %612 = vmatprep.subr.mxu0 0.0
        %613 = vmatpush1.msra.mxu0 0.0
        %614 = vmatprep.subr.mxu0 0.0
        %615 = vmatpush1.msra.mxu0 0.0
        %616 = vmatprep.subr.mxu0 0.0
        %617 = vmatpush1.msra.mxu0 0.0
        %618 = vmatprep.subr.mxu0 0.0
        %619 = vmatpush1.msra.mxu0 0.0
        %620 = vmatprep.subr.mxu0 0.0
        %621 = vmatpush1.msra.mxu0 0.0
        %622 = vmatprep.subr.mxu0 0.0
        %623 = vmatpush1.msra.mxu0 0.0
        %624 = vmatprep.subr.mxu0 0.0
        %625 = vmatpush1.msra.mxu0 0.0
        %626 = vmatprep.subr.mxu0 0.0
        %627 = vmatpush1.msra.mxu0 0.0
        %628 = vmatprep.subr.mxu0 0.0
        %629 = vmatpush1.msra.mxu0 0.0
        %630 = vmatprep.subr.mxu0 0.0
        %631 = vmatpush1.msra.mxu0 0.0
        %632 = vmatprep.subr.mxu0 0.0
        %633 = vmatpush1.msra.mxu0 0.0
        %634 = vmatprep.subr.mxu0 0.0
        %635 = vmatpush1.msra.mxu0 0.0
        %636 = vmatprep.subr.mxu0 0.0
        %637 = vmatpush1.msra.mxu0 0.0
        %638 = vmatprep.subr.mxu0 0.0
        %639 = vmatpush1.msra.mxu0 0.0
        %640 = vmatprep.subr.mxu0 0.0
        %641 = vmatpush1.msra.mxu0 0.0
        %642 = vmatprep.subr.mxu0 0.0
        %643 = vmatpush1.msra.mxu0 0.0
        %644 = vmatprep.subr.mxu0 0.0
        %645 = vmatpush1.msra.mxu0 0.0
        %646 = vmatprep.subr.mxu0 0.0
        %647 = vmatpush1.msra.mxu0 0.0
        %648 = vmatprep.subr.mxu0 0.0
        %649 = vmatpush1.msra.mxu0 0.0
        %650 = vmatprep.subr.mxu0 0.0
        %651 = vmatpush1.msra.mxu0 0.0
        %652 = vmatprep.subr.mxu0 0.0
        %653 = vmatpush1.msra.mxu0 0.0
        %654 = vmatprep.subr.mxu0 0.0
        %655 = vmatpush1.msra.mxu0 0.0
        %656 = vmatprep.mubr.f32.mxu0 0.0
        %657 = vmatmul.mubr.f32.gmra.mrb[0].mxu0 %v590
        %v658 = vpop.f32.mrb[0].mxu0
        %v659 = vadd.f32 0.0, %v658
        %v660 = vpop.f32.mrb[0].mxu0
        %661 = vdwg.mxu0
        %v663 = vsel %vm261, %v419, 0
        %665 = vmatprep.subr.mxu0 0.0
        %666 = vmatpush1.msra.mxu0 %v250
        %667 = vmatprep.subr.mxu0 0.0
        %668 = vmatpush1.msra.mxu0 %v251
        %669 = vmatprep.subr.mxu0 0.0
        %670 = vmatpush1.msra.mxu0 0.0
        %671 = vmatprep.subr.mxu0 0.0
        %672 = vmatpush1.msra.mxu0 0.0
        %673 = vmatprep.subr.mxu0 0.0
        %674 = vmatpush1.msra.mxu0 0.0
        %675 = vmatprep.subr.mxu0 0.0
        %676 = vmatpush1.msra.mxu0 0.0
        %677 = vmatprep.subr.mxu0 0.0
        %678 = vmatpush1.msra.mxu0 0.0
        %679 = vmatprep.subr.mxu0 0.0
        %680 = vmatpush1.msra.mxu0 0.0
        %681 = vmatprep.subr.mxu0 0.0
        %682 = vmatpush1.msra.mxu0 0.0
        %683 = vmatprep.subr.mxu0 0.0
        %684 = vmatpush1.msra.mxu0 0.0
        %685 = vmatprep.subr.mxu0 0.0
        %686 = vmatpush1.msra.mxu0 0.0
        %687 = vmatprep.subr.mxu0 0.0
        %688 = vmatpush1.msra.mxu0 0.0
        %689 = vmatprep.subr.mxu0 0.0
        %690 = vmatpush1.msra.mxu0 0.0
        %691 = vmatprep.subr.mxu0 0.0
        %692 = vmatpush1.msra.mxu0 0.0
        %693 = vmatprep.subr.mxu0 0.0
        %694 = vmatpush1.msra.mxu0 0.0
        %695 = vmatprep.subr.mxu0 0.0
        %696 = vmatpush1.msra.mxu0 0.0
        %697 = vmatprep.subr.mxu0 0.0
        %698 = vmatpush1.msra.mxu0 0.0
        %699 = vmatprep.subr.mxu0 0.0
        %700 = vmatpush1.msra.mxu0 0.0
        %701 = vmatprep.subr.mxu0 0.0
        %702 = vmatpush1.msra.mxu0 0.0
        %703 = vmatprep.subr.mxu0 0.0
        %704 = vmatpush1.msra.mxu0 0.0
        %705 = vmatprep.subr.mxu0 0.0
        %706 = vmatpush1.msra.mxu0 0.0
        %707 = vmatprep.subr.mxu0 0.0
        %708 = vmatpush1.msra.mxu0 0.0
        %709 = vmatprep.subr.mxu0 0.0
        %710 = vmatpush1.msra.mxu0 0.0
        %711 = vmatprep.subr.mxu0 0.0
        %712 = vmatpush1.msra.mxu0 0.0
        %713 = vmatprep.subr.mxu0 0.0
        %714 = vmatpush1.msra.mxu0 0.0
        %715 = vmatprep.subr.mxu0 0.0
        %716 = vmatpush1.msra.mxu0 0.0
        %717 = vmatprep.subr.mxu0 0.0
        %718 = vmatpush1.msra.mxu0 0.0
        %719 = vmatprep.subr.mxu0 0.0
        %720 = vmatpush1.msra.mxu0 0.0
        %721 = vmatprep.subr.mxu0 0.0
        %722 = vmatpush1.msra.mxu0 0.0
        %723 = vmatprep.subr.mxu0 0.0
        %724 = vmatpush1.msra.mxu0 0.0
        %725 = vmatprep.subr.mxu0 0.0
        %726 = vmatpush1.msra.mxu0 0.0
        %727 = vmatprep.subr.mxu0 0.0
        %728 = vmatpush1.msra.mxu0 0.0
        %729 = vmatprep.mubr.f32.mxu0 0.0
        %730 = vmatmul.mubr.f32.gmra.mrb[0].mxu0 %v663
        %v731 = vpop.f32.mrb[0].mxu0
        %v732 = vadd.f32 %v659, %v731
        %v733 = vpop.f32.mrb[0].mxu0
        %734 = vdwg.mxu0
        %735 = vrot.lane.b32.xlu0 %v246, 96
        %v736 = vpop.permute.xlu0 %735
        %737 = vrot.lane.b32.xlu0 %v246, 32
        %v738 = vpop.permute.xlu0 %737
        %v739 = vsel %vm261, %v736, 0
        %v741 = vsel %vm261, %v738, 0
        %743 = vmatprep.subr.mxu0 0.0
        %744 = vmatpush1.xpose.msra.mxu0 %v741
        %745 = vmatprep.subr.mxu0 0.0
        %746 = vmatpush1.xpose.msra.mxu0 0.0
        %747 = vmatprep.subr.mxu0 0.0
        %748 = vmatpush1.xpose.msra.mxu0 0.0
        %749 = vmatprep.subr.mxu0 0.0
        %750 = vmatpush1.xpose.msra.mxu0 0.0
        %751 = vmatprep.subr.mxu0 0.0
        %752 = vmatpush1.xpose.msra.mxu0 0.0
        %753 = vmatprep.subr.mxu0 0.0
        %754 = vmatpush1.xpose.msra.mxu0 0.0
        %755 = vmatprep.subr.mxu0 0.0
        %756 = vmatpush1.xpose.msra.mxu0 0.0
        %757 = vmatprep.subr.mxu0 0.0
        %758 = vmatpush1.xpose.msra.mxu0 0.0
        %759 = vmatprep.subr.mxu0 0.0
        %760 = vmatpush1.xpose.msra.mxu0 0.0
        %761 = vmatprep.subr.mxu0 0.0
        %762 = vmatpush1.xpose.msra.mxu0 0.0
        %763 = vmatprep.subr.mxu0 0.0
        %764 = vmatpush1.xpose.msra.mxu0 0.0
        %765 = vmatprep.subr.mxu0 0.0
        %766 = vmatpush1.xpose.msra.mxu0 0.0
        %767 = vmatprep.subr.mxu0 0.0
        %768 = vmatpush1.xpose.msra.mxu0 0.0
        %769 = vmatprep.subr.mxu0 0.0
        %770 = vmatpush1.xpose.msra.mxu0 0.0
        %771 = vmatprep.subr.mxu0 0.0
        %772 = vmatpush1.xpose.msra.mxu0 0.0
        %773 = vmatprep.subr.mxu0 0.0
        %774 = vmatpush1.xpose.msra.mxu0 0.0
        %775 = vmatprep.subr.mxu0 0.0
        %776 = vmatpush1.xpose.msra.mxu0 0.0
        %777 = vmatprep.subr.mxu0 0.0
        %778 = vmatpush1.xpose.msra.mxu0 0.0
        %779 = vmatprep.subr.mxu0 0.0
        %780 = vmatpush1.xpose.msra.mxu0 0.0
        %781 = vmatprep.subr.mxu0 0.0
        %782 = vmatpush1.xpose.msra.mxu0 0.0
        %783 = vmatprep.subr.mxu0 0.0
        %784 = vmatpush1.xpose.msra.mxu0 0.0
        %785 = vmatprep.subr.mxu0 0.0
        %786 = vmatpush1.xpose.msra.mxu0 0.0
        %787 = vmatprep.subr.mxu0 0.0
        %788 = vmatpush1.xpose.msra.mxu0 0.0
        %789 = vmatprep.subr.mxu0 0.0
        %790 = vmatpush1.xpose.msra.mxu0 0.0
        %791 = vmatprep.subr.mxu0 0.0
        %792 = vmatpush1.xpose.msra.mxu0 0.0
        %793 = vmatprep.subr.mxu0 0.0
        %794 = vmatpush1.xpose.msra.mxu0 0.0
        %795 = vmatprep.subr.mxu0 0.0
        %796 = vmatpush1.xpose.msra.mxu0 0.0
        %797 = vmatprep.subr.mxu0 0.0
        %798 = vmatpush1.xpose.msra.mxu0 0.0
        %799 = vmatprep.subr.mxu0 0.0
        %800 = vmatpush1.xpose.msra.mxu0 0.0
        %801 = vmatprep.subr.mxu0 0.0
        %802 = vmatpush1.xpose.msra.mxu0 0.0
        %803 = vmatprep.subr.mxu0 0.0
        %804 = vmatpush1.xpose.msra.mxu0 0.0
        %805 = vmatprep.subr.mxu0 0.0
        %806 = vmatpush1.xpose.msra.mxu0 0.0
        %807 = vmatprep.mubr.f32.mxu0 0.0
        %808 = vmatmul.mubr.f32.gmra.mrb[0].mxu0 %v739
        %v809 = vpop.f32.mrb[0].mxu0
        %v810 = vadd.f32 0.0, %v809
        %v811 = vpop.f32.mrb[0].mxu0
        %812 = vdwg.mxu0
        %v813 = vmul.f32 %v810, 0.25
        %v814 = vsel %vm337, %v813, -inf
        %815 = vmax.xlane.f32.xlu0 %v814
        %v816 = vpop.xlane.xlu0 %815
        %v817 = vsub.f32 %v813, %v816
        %v818 = vmul.f32 %v817, 1.442695
        %v819 = vpow.pop %v818
        %v820 = vsel %vm337, %v819, 0.0
        %821 = vadd.xlane.f32.xlu0 %v820
        %v822 = vpop.xlane.xlu0 %821
        %v823 = vrcp.pop %v822
        %v824 = vmul.f32 %v819, %v823
        %825 = vrot.lane.b32.xlu0 %v248, 96
        %v826 = vpop.permute.xlu0 %825
        %v829 = vsel %vm337, %v824, 0
        %831 = vmatprep.subr.mxu0 0.0
        %832 = vmatpush1.msra.mxu0 %v826
        %833 = vmatprep.subr.mxu0 0.0
        %834 = vmatpush1.msra.mxu0 0.0
        %835 = vmatprep.subr.mxu0 0.0
        %836 = vmatpush1.msra.mxu0 0.0
        %837 = vmatprep.subr.mxu0 0.0
        %838 = vmatpush1.msra.mxu0 0.0
        %839 = vmatprep.subr.mxu0 0.0
        %840 = vmatpush1.msra.mxu0 0.0
        %841 = vmatprep.subr.mxu0 0.0
        %842 = vmatpush1.msra.mxu0 0.0
        %843 = vmatprep.subr.mxu0 0.0
        %844 = vmatpush1.msra.mxu0 0.0
        %845 = vmatprep.subr.mxu0 0.0
        %846 = vmatpush1.msra.mxu0 0.0
        %847 = vmatprep.subr.mxu0 0.0
        %848 = vmatpush1.msra.mxu0 0.0
        %849 = vmatprep.subr.mxu0 0.0
        %850 = vmatpush1.msra.mxu0 0.0
        %851 = vmatprep.subr.mxu0 0.0
        %852 = vmatpush1.msra.mxu0 0.0
        %853 = vmatprep.subr.mxu0 0.0
        %854 = vmatpush1.msra.mxu0 0.0
        %855 = vmatprep.subr.mxu0 0.0
        %856 = vmatpush1.msra.mxu0 0.0
        %857 = vmatprep.subr.mxu0 0.0
        %858 = vmatpush1.msra.mxu0 0.0
        %859 = vmatprep.subr.mxu0 0.0
        %860 = vmatpush1.msra.mxu0 0.0
        %861 = vmatprep.subr.mxu0 0.0
        %862 = vmatpush1.msra.mxu0 0.0
        %863 = vmatprep.subr.mxu0 0.0
        %864 = vmatpush1.msra.mxu0 0.0
        %865 = vmatprep.subr.mxu0 0.0
        %866 = vmatpush1.msra.mxu0 0.0
        %867 = vmatprep.subr.mxu0 0.0
        %868 = vmatpush1.msra.mxu0 0.0
        %869 = vmatprep.subr.mxu0 0.0
        %870 = vmatpush1.msra.mxu0 0.0
        %871 = vmatprep.subr.mxu0 0.0
        %872 = vmatpush1.msra.mxu0 0.0
        %873 = vmatprep.subr.mxu0 0.0
        %874 = vmatpush1.msra.mxu0 0.0
        %875 = vmatprep.subr.mxu0 0.0
        %876 = vmatpush1.msra.mxu0 0.0
        %877 = vmatprep.subr.mxu0 0.0
        %878 = vmatpush1.msra.mxu0 0.0
        %879 = vmatprep.subr.mxu0 0.0
        %880 = vmatpush1.msra.mxu0 0.0
        %881 = vmatprep.subr.mxu0 0.0
        %882 = vmatpush1.msra.mxu0 0.0
        %883 = vmatprep.subr.mxu0 0.0
        %884 = vmatpush1.msra.mxu0 0.0
        %885 = vmatprep.subr.mxu0 0.0
        %886 = vmatpush1.msra.mxu0 0.0
        %887 = vmatprep.subr.mxu0 0.0
        %888 = vmatpush1.msra.mxu0 0.0
        %889 = vmatprep.subr.mxu0 0.0
        %890 = vmatpush1.msra.mxu0 0.0
        %891 = vmatprep.subr.mxu0 0.0
        %892 = vmatpush1.msra.mxu0 0.0
        %893 = vmatprep.subr.mxu0 0.0
        %894 = vmatpush1.msra.mxu0 0.0
        %895 = vmatprep.mubr.f32.mxu0 0.0
        %896 = vmatmul.mubr.f32.gmra.mrb[0].mxu0 %v829
        %v897 = vpop.f32.mrb[0].mxu0
        %v898 = vadd.f32 0.0, %v897
        %v899 = vpop.f32.mrb[0].mxu0
        %900 = vdwg.mxu0
        %v902 = vsel %vm261, %v898, 0
        %904 = vmatprep.subr.mxu0 0.0
        %905 = vmatpush1.msra.mxu0 %v254
        %906 = vmatprep.subr.mxu0 0.0
        %907 = vmatpush1.msra.mxu0 %v255
        %908 = vmatprep.subr.mxu0 0.0
        %909 = vmatpush1.msra.mxu0 0.0
        %910 = vmatprep.subr.mxu0 0.0
        %911 = vmatpush1.msra.mxu0 0.0
        %912 = vmatprep.subr.mxu0 0.0
        %913 = vmatpush1.msra.mxu0 0.0
        %914 = vmatprep.subr.mxu0 0.0
        %915 = vmatpush1.msra.mxu0 0.0
        %916 = vmatprep.subr.mxu0 0.0
        %917 = vmatpush1.msra.mxu0 0.0
        %918 = vmatprep.subr.mxu0 0.0
        %919 = vmatpush1.msra.mxu0 0.0
        %920 = vmatprep.subr.mxu0 0.0
        %921 = vmatpush1.msra.mxu0 0.0
        %922 = vmatprep.subr.mxu0 0.0
        %923 = vmatpush1.msra.mxu0 0.0
        %924 = vmatprep.subr.mxu0 0.0
        %925 = vmatpush1.msra.mxu0 0.0
        %926 = vmatprep.subr.mxu0 0.0
        %927 = vmatpush1.msra.mxu0 0.0
        %928 = vmatprep.subr.mxu0 0.0
        %929 = vmatpush1.msra.mxu0 0.0
        %930 = vmatprep.subr.mxu0 0.0
        %931 = vmatpush1.msra.mxu0 0.0
        %932 = vmatprep.subr.mxu0 0.0
        %933 = vmatpush1.msra.mxu0 0.0
        %934 = vmatprep.subr.mxu0 0.0
        %935 = vmatpush1.msra.mxu0 0.0
        %936 = vmatprep.subr.mxu0 0.0
        %937 = vmatpush1.msra.mxu0 0.0
        %938 = vmatprep.subr.mxu0 0.0
        %939 = vmatpush1.msra.mxu0 0.0
        %940 = vmatprep.subr.mxu0 0.0
        %941 = vmatpush1.msra.mxu0 0.0
        %942 = vmatprep.subr.mxu0 0.0
        %943 = vmatpush1.msra.mxu0 0.0
        %944 = vmatprep.subr.mxu0 0.0
        %945 = vmatpush1.msra.mxu0 0.0
        %946 = vmatprep.subr.mxu0 0.0
        %947 = vmatpush1.msra.mxu0 0.0
        %948 = vmatprep.subr.mxu0 0.0
        %949 = vmatpush1.msra.mxu0 0.0
        %950 = vmatprep.subr.mxu0 0.0
        %951 = vmatpush1.msra.mxu0 0.0
        %952 = vmatprep.subr.mxu0 0.0
        %953 = vmatpush1.msra.mxu0 0.0
        %954 = vmatprep.subr.mxu0 0.0
        %955 = vmatpush1.msra.mxu0 0.0
        %956 = vmatprep.subr.mxu0 0.0
        %957 = vmatpush1.msra.mxu0 0.0
        %958 = vmatprep.subr.mxu0 0.0
        %959 = vmatpush1.msra.mxu0 0.0
        %960 = vmatprep.subr.mxu0 0.0
        %961 = vmatpush1.msra.mxu0 0.0
        %962 = vmatprep.subr.mxu0 0.0
        %963 = vmatpush1.msra.mxu0 0.0
        %964 = vmatprep.subr.mxu0 0.0
        %965 = vmatpush1.msra.mxu0 0.0
        %966 = vmatprep.subr.mxu0 0.0
        %967 = vmatpush1.msra.mxu0 0.0
        %968 = vmatprep.mubr.f32.mxu0 0.0
        %969 = vmatmul.mubr.f32.gmra.mrb[0].mxu0 %v902
        %v970 = vpop.f32.mrb[0].mxu0
        %v971 = vadd.f32 0.0, %v970
        %v972 = vpop.f32.mrb[0].mxu0
        %973 = vdwg.mxu0
        %v974 = vadd.f32 %v732, %v971
        %975 = vrot.lane.b32.xlu0 %v246, 80
        %v976 = vpop.permute.xlu0 %975
        %977 = vrot.lane.b32.xlu0 %v246, 16
        %v978 = vpop.permute.xlu0 %977
        %v979 = vsel %vm261, %v976, 0
        %v981 = vsel %vm261, %v978, 0
        %983 = vmatprep.subr.mxu0 0.0
        %984 = vmatpush1.xpose.msra.mxu0 %v981
        %985 = vmatprep.subr.mxu0 0.0
        %986 = vmatpush1.xpose.msra.mxu0 0.0
        %987 = vmatprep.subr.mxu0 0.0
        %988 = vmatpush1.xpose.msra.mxu0 0.0
        %989 = vmatprep.subr.mxu0 0.0
        %990 = vmatpush1.xpose.msra.mxu0 0.0
        %991 = vmatprep.subr.mxu0 0.0
        %992 = vmatpush1.xpose.msra.mxu0 0.0
        %993 = vmatprep.subr.mxu0 0.0
        %994 = vmatpush1.xpose.msra.mxu0 0.0
        %995 = vmatprep.subr.mxu0 0.0
        %996 = vmatpush1.xpose.msra.mxu0 0.0
        %997 = vmatprep.subr.mxu0 0.0
        %998 = vmatpush1.xpose.msra.mxu0 0.0
        %999 = vmatprep.subr.mxu0 0.0
        %1000 = vmatpush1.xpose.msra.mxu0 0.0
        %1001 = vmatprep.subr.mxu0 0.0
        %1002 = vmatpush1.xpose.msra.mxu0 0.0
        %1003 = vmatprep.subr.mxu0 0.0
        %1004 = vmatpush1.xpose.msra.mxu0 0.0
        %1005 = vmatprep.subr.mxu0 0.0
        %1006 = vmatpush1.xpose.msra.mxu0 0.0
        %1007 = vmatprep.subr.mxu0 0.0
        %1008 = vmatpush1.xpose.msra.mxu0 0.0
        %1009 = vmatprep.subr.mxu0 0.0
        %1010 = vmatpush1.xpose.msra.mxu0 0.0
        %1011 = vmatprep.subr.mxu0 0.0
        %1012 = vmatpush1.xpose.msra.mxu0 0.0
        %1013 = vmatprep.subr.mxu0 0.0
        %1014 = vmatpush1.xpose.msra.mxu0 0.0
        %1015 = vmatprep.subr.mxu0 0.0
        %1016 = vmatpush1.xpose.msra.mxu0 0.0
        %1017 = vmatprep.subr.mxu0 0.0
        %1018 = vmatpush1.xpose.msra.mxu0 0.0
        %1019 = vmatprep.subr.mxu0 0.0
        %1020 = vmatpush1.xpose.msra.mxu0 0.0
        %1021 = vmatprep.subr.mxu0 0.0
        %1022 = vmatpush1.xpose.msra.mxu0 0.0
        %1023 = vmatprep.subr.mxu0 0.0
        %1024 = vmatpush1.xpose.msra.mxu0 0.0
        %1025 = vmatprep.subr.mxu0 0.0
        %1026 = vmatpush1.xpose.msra.mxu0 0.0
        %1027 = vmatprep.subr.mxu0 0.0
        %1028 = vmatpush1.xpose.msra.mxu0 0.0
        %1029 = vmatprep.subr.mxu0 0.0
        %1030 = vmatpush1.xpose.msra.mxu0 0.0
        %1031 = vmatprep.subr.mxu0 0.0
        %1032 = vmatpush1.xpose.msra.mxu0 0.0
        %1033 = vmatprep.subr.mxu0 0.0
        %1034 = vmatpush1.xpose.msra.mxu0 0.0
        %1035 = vmatprep.subr.mxu0 0.0
        %1036 = vmatpush1.xpose.msra.mxu0 0.0
        %1037 = vmatprep.subr.mxu0 0.0
        %1038 = vmatpush1.xpose.msra.mxu0 0.0
        %1039 = vmatprep.subr.mxu0 0.0
        %1040 = vmatpush1.xpose.msra.mxu0 0.0
        %1041 = vmatprep.subr.mxu0 0.0
        %1042 = vmatpush1.xpose.msra.mxu0 0.0
        %1043 = vmatprep.subr.mxu0 0.0
        %1044 = vmatpush1.xpose.msra.mxu0 0.0
        %1045 = vmatprep.subr.mxu0 0.0
        %1046 = vmatpush1.xpose.msra.mxu0 0.0
        %1047 = vmatprep.mubr.f32.mxu0 0.0
        %1048 = vmatmul.mubr.f32.gmra.mrb[0].mxu0 %v979
        %v1049 = vpop.f32.mrb[0].mxu0
        %v1050 = vadd.f32 0.0, %v1049
        %v1051 = vpop.f32.mrb[0].mxu0
        %1052 = vdwg.mxu0
        %v1053 = vmul.f32 %v1050, 0.25
        %v1054 = vsel %vm337, %v1053, -inf
        %1055 = vmax.xlane.f32.xlu0 %v1054
        %v1056 = vpop.xlane.xlu0 %1055
        %v1057 = vsub.f32 %v1053, %v1056
        %v1058 = vmul.f32 %v1057, 1.442695
        %v1059 = vpow.pop %v1058
        %v1060 = vsel %vm337, %v1059, 0.0
        %1061 = vadd.xlane.f32.xlu0 %v1060
        %v1062 = vpop.xlane.xlu0 %1061
        %v1063 = vrcp.pop %v1062
        %v1064 = vmul.f32 %v1059, %v1063
        %1065 = vrot.lane.b32.xlu0 %v248, 80
        %v1066 = vpop.permute.xlu0 %1065
        %v1069 = vsel %vm337, %v1064, 0
        %1071 = vmatprep.subr.mxu0 0.0
        %1072 = vmatpush1.msra.mxu0 %v1066
        %1073 = vmatprep.subr.mxu0 0.0
        %1074 = vmatpush1.msra.mxu0 0.0
        %1075 = vmatprep.subr.mxu0 0.0
        %1076 = vmatpush1.msra.mxu0 0.0
        %1077 = vmatprep.subr.mxu0 0.0
        %1078 = vmatpush1.msra.mxu0 0.0
        %1079 = vmatprep.subr.mxu0 0.0
        %1080 = vmatpush1.msra.mxu0 0.0
        %1081 = vmatprep.subr.mxu0 0.0
        %1082 = vmatpush1.msra.mxu0 0.0
        %1083 = vmatprep.subr.mxu0 0.0
        %1084 = vmatpush1.msra.mxu0 0.0
        %1085 = vmatprep.subr.mxu0 0.0
        %1086 = vmatpush1.msra.mxu0 0.0
        %1087 = vmatprep.subr.mxu0 0.0
        %1088 = vmatpush1.msra.mxu0 0.0
        %1089 = vmatprep.subr.mxu0 0.0
        %1090 = vmatpush1.msra.mxu0 0.0
        %1091 = vmatprep.subr.mxu0 0.0
        %1092 = vmatpush1.msra.mxu0 0.0
        %1093 = vmatprep.subr.mxu0 0.0
        %1094 = vmatpush1.msra.mxu0 0.0
        %1095 = vmatprep.subr.mxu0 0.0
        %1096 = vmatpush1.msra.mxu0 0.0
        %1097 = vmatprep.subr.mxu0 0.0
        %1098 = vmatpush1.msra.mxu0 0.0
        %1099 = vmatprep.subr.mxu0 0.0
        %1100 = vmatpush1.msra.mxu0 0.0
        %1101 = vmatprep.subr.mxu0 0.0
        %1102 = vmatpush1.msra.mxu0 0.0
        %1103 = vmatprep.subr.mxu0 0.0
        %1104 = vmatpush1.msra.mxu0 0.0
        %1105 = vmatprep.subr.mxu0 0.0
        %1106 = vmatpush1.msra.mxu0 0.0
        %1107 = vmatprep.subr.mxu0 0.0
        %1108 = vmatpush1.msra.mxu0 0.0
        %1109 = vmatprep.subr.mxu0 0.0
        %1110 = vmatpush1.msra.mxu0 0.0
        %1111 = vmatprep.subr.mxu0 0.0
        %1112 = vmatpush1.msra.mxu0 0.0
        %1113 = vmatprep.subr.mxu0 0.0
        %1114 = vmatpush1.msra.mxu0 0.0
        %1115 = vmatprep.subr.mxu0 0.0
        %1116 = vmatpush1.msra.mxu0 0.0
        %1117 = vmatprep.subr.mxu0 0.0
        %1118 = vmatpush1.msra.mxu0 0.0
        %1119 = vmatprep.subr.mxu0 0.0
        %1120 = vmatpush1.msra.mxu0 0.0
        %1121 = vmatprep.subr.mxu0 0.0
        %1122 = vmatpush1.msra.mxu0 0.0
        %1123 = vmatprep.subr.mxu0 0.0
        %1124 = vmatpush1.msra.mxu0 0.0
        %1125 = vmatprep.subr.mxu0 0.0
        %1126 = vmatpush1.msra.mxu0 0.0
        %1127 = vmatprep.subr.mxu0 0.0
        %1128 = vmatpush1.msra.mxu0 0.0
        %1129 = vmatprep.subr.mxu0 0.0
        %1130 = vmatpush1.msra.mxu0 0.0
        %1131 = vmatprep.subr.mxu0 0.0
        %1132 = vmatpush1.msra.mxu0 0.0
        %1133 = vmatprep.subr.mxu0 0.0
        %1134 = vmatpush1.msra.mxu0 0.0
        %1135 = vmatprep.mubr.f32.mxu0 0.0
        %1136 = vmatmul.mubr.f32.gmra.mrb[0].mxu0 %v1069
        %v1137 = vpop.f32.mrb[0].mxu0
        %v1138 = vadd.f32 0.0, %v1137
        %v1139 = vpop.f32.mrb[0].mxu0
        %1140 = vdwg.mxu0
        %v1142 = vsel %vm261, %v1138, 0
        %1144 = vmatprep.subr.mxu0 0.0
        %1145 = vmatpush1.msra.mxu0 %v256
        %1146 = vmatprep.subr.mxu0 0.0
        %1147 = vmatpush1.msra.mxu0 %v257
        %1148 = vmatprep.subr.mxu0 0.0
        %1149 = vmatpush1.msra.mxu0 0.0
        %1150 = vmatprep.subr.mxu0 0.0
        %1151 = vmatpush1.msra.mxu0 0.0
        %1152 = vmatprep.subr.mxu0 0.0
        %1153 = vmatpush1.msra.mxu0 0.0
        %1154 = vmatprep.subr.mxu0 0.0
        %1155 = vmatpush1.msra.mxu0 0.0
        %1156 = vmatprep.subr.mxu0 0.0
        %1157 = vmatpush1.msra.mxu0 0.0
        %1158 = vmatprep.subr.mxu0 0.0
        %1159 = vmatpush1.msra.mxu0 0.0
        %1160 = vmatprep.subr.mxu0 0.0
        %1161 = vmatpush1.msra.mxu0 0.0
        %1162 = vmatprep.subr.mxu0 0.0
        %1163 = vmatpush1.msra.mxu0 0.0
        %1164 = vmatprep.subr.mxu0 0.0
        %1165 = vmatpush1.msra.mxu0 0.0
        %1166 = vmatprep.subr.mxu0 0.0
        %1167 = vmatpush1.msra.mxu0 0.0
        %1168 = vmatprep.subr.mxu0 0.0
        %1169 = vmatpush1.msra.mxu0 0.0
        %1170 = vmatprep.subr.mxu0 0.0
        %1171 = vmatpush1.msra.mxu0 0.0
        %1172 = vmatprep.subr.mxu0 0.0
        %1173 = vmatpush1.msra.mxu0 0.0
        %1174 = vmatprep.subr.mxu0 0.0
        %1175 = vmatpush1.msra.mxu0 0.0
        %1176 = vmatprep.subr.mxu0 0.0
        %1177 = vmatpush1.msra.mxu0 0.0
        %1178 = vmatprep.subr.mxu0 0.0
        %1179 = vmatpush1.msra.mxu0 0.0
        %1180 = vmatprep.subr.mxu0 0.0
        %1181 = vmatpush1.msra.mxu0 0.0
        %1182 = vmatprep.subr.mxu0 0.0
        %1183 = vmatpush1.msra.mxu0 0.0
        %1184 = vmatprep.subr.mxu0 0.0
        %1185 = vmatpush1.msra.mxu0 0.0
        %1186 = vmatprep.subr.mxu0 0.0
        %1187 = vmatpush1.msra.mxu0 0.0
        %1188 = vmatprep.subr.mxu0 0.0
        %1189 = vmatpush1.msra.mxu0 0.0
        %1190 = vmatprep.subr.mxu0 0.0
        %1191 = vmatpush1.msra.mxu0 0.0
        %1192 = vmatprep.subr.mxu0 0.0
        %1193 = vmatpush1.msra.mxu0 0.0
        %1194 = vmatprep.subr.mxu0 0.0
        %1195 = vmatpush1.msra.mxu0 0.0
        %1196 = vmatprep.subr.mxu0 0.0
        %1197 = vmatpush1.msra.mxu0 0.0
        %1198 = vmatprep.subr.mxu0 0.0
        %1199 = vmatpush1.msra.mxu0 0.0
        %1200 = vmatprep.subr.mxu0 0.0
        %1201 = vmatpush1.msra.mxu0 0.0
        %1202 = vmatprep.subr.mxu0 0.0
        %1203 = vmatpush1.msra.mxu0 0.0
        %1204 = vmatprep.subr.mxu0 0.0
        %1205 = vmatpush1.msra.mxu0 0.0
        %1206 = vmatprep.subr.mxu0 0.0
        %1207 = vmatpush1.msra.mxu0 0.0
        %1208 = vmatprep.mubr.f32.mxu0 0.0
        %1209 = vmatmul.mubr.f32.gmra.mrb[0].mxu0 %v1142
        %v1210 = vpop.f32.mrb[0].mxu0
        %v1211 = vadd.f32 0.0, %v1210
        %v1212 = vpop.f32.mrb[0].mxu0
        %1213 = vdwg.mxu0
        %v1214 = vadd.f32 %v974, %v1211
        %1215 = vst.msk [vmem:[%s161] sm:$0xff] %vm175, %v1214
        %s1216 = sand.u32 %s93, 1
        %s1217 = scalar_lea.sflag [#allocation3], %s1216
        %s1218 = sand.u32 %s93, 1
        %s1219 = smul.addr %s1218, 8
        %s1220 = scalar_lea.vmem [#allocation2], %s1219
        // Predicated region
        $region33: #{tpu_custom_call.1} parent=31 // pred_check
          %p1221 = pneg %p103
        $region34: #{tpu_custom_call.1} parent=31 // pred_check_branch
          %1223 = sbr.rel (%p1221) target = $region36
        $region35: #{tpu_custom_call.1} parent=31 // pred_region
          %s1225 = ssub.s32 128, 128
          %1226 = vsyncadd %s1217, %s1225
          %s1227 = smul.addr %s17, 128
          %s1228 = scalar_lea.hbm %s3, %s1227
          %s1230 = sshll.u32 %s1220, 4
          %s1231 = int_to_ptr.vmem [resolvable:$true] %s1230
          %1233 = dma.vmem_to_hbm [thread:$0]  %s1231, 128, %s1228, %s1217
        $region36: #{tpu_custom_call.1} parent=31 // pred_fallthru
          _
      $region32: #{tpu_custom_call.1} parent=5 // pred_fallthru
        _
      %p1234 = scmp.le.s32.totalorder 2, %s12
      // Predicated region
      $region37: #{tpu_custom_call.1} parent=5 // pred_check
        %p1235 = pneg %p1234
      $region38: #{tpu_custom_call.1} parent=5 // pred_check_branch
        %1237 = sbr.rel (%p1235) target = $region40
      $region39: #{tpu_custom_call.1} parent=5 // pred_region
        %s1238 = ssub.s32 %s12, 2
        // Predicated region
        $region41: #{tpu_custom_call.1} parent=39 // pred_check
          %p1239 = pneg %p109
        $region42: #{tpu_custom_call.1} parent=39 // pred_check_branch
          %1241 = sbr.rel (%p1239) target = $region44
        $region43: #{tpu_custom_call.1} parent=39 // pred_region
          %s1242 = sand.u32 %s94, 1
          %s1243 = scalar_lea.sflag [#allocation3], %s1242
          %s1244 = sand.u32 %s94, 1
          %s1245 = smul.addr %s1244, 8
          %s1246 = scalar_lea.vmem [#allocation2], %s1245
          %1247 = dma.done %s1243, 128
        $region44: #{tpu_custom_call.1} parent=39 // pred_fallthru
          _
      $region40: #{tpu_custom_call.1} parent=5 // pred_fallthru
        _
    $region6: #{tpu_custom_call.1} parent=1 // loop_footer
      %s16 = sadd.s32 1, %s12
    $region7: #{tpu_custom_call.1} parent=1 // loop_footer_branch
      %11 = sbr.rel target = $region3
    $region8: #{tpu_custom_call.1} parent=1 // loop_exit
      _
    %1248 = vsyncpa [#allocation3], 1
    %s1249 = scalar_lea.sflag [#allocation3], 1
    %1250 = vsyncpa %s1249, 1

</llo_original>
